<compile_context>
chip_gen: v7x
topology: tpu7x:2x2x1
jax: 0.10.0
libtpu: 0.0.40
codegen_flags: <defaults>
</compile_context>

<pallas_src>
import jax
import jax.numpy as jnp
import numpy as np
from jax.experimental import pallas as pl
from jax.experimental.pallas import tpu as pltpu


def _round_up(x, m):
    return ((x + m - 1) // m) * m


def ddpg_qnet_kernel(x_ref, w1_ref, b1_ref, wq_ref, bq_ref, wo_ref, bo_ref,
                     out_ref):
    # fused fc_s / fc_a (block-diagonal W1): (TB, in) @ (in, 128) -> (TB, 128)
    h1 = jnp.dot(x_ref[...], w1_ref[...], preferred_element_type=jnp.float32)
    h1 = jnp.maximum(h1 + b1_ref[...], 0.0)

    # fc_q: (TB, 128) @ (128, 32) -> (TB, 32)
    hq = jnp.dot(h1.astype(jnp.bfloat16), wq_ref[...],
                 preferred_element_type=jnp.float32)
    hq = jnp.maximum(hq + bq_ref[...], 0.0)

    # fc_out: VPU multiply + lane reduction (avoids a degenerate N=1 MXU pass)
    out_ref[...] = jnp.sum(hq * wo_ref[...], axis=-1, keepdims=True) + bo_ref[...]


def ddpg_qnet_forward(s, a, params, *, block_b=512):
    """s: (B, state_dim), a: (B, action_dim) -> (B, 1) float32."""
    w1, b1, wq, bq, wo_row, bo = params
    in_dim = w1.shape[0]
    B = s.shape[0]

    # Fuse the concat in the wrapper; cast activations to bf16 (halves HBM
    # traffic for the dominant per-row bytes).
    x = jnp.concatenate([s, a], axis=1).astype(jnp.bfloat16)
    assert x.shape[1] == in_dim

    # Batch tile: multiple of 8 sublanes; pad the batch to a whole number of
    # tiles (padded rows are sliced off at the end).
    tb = min(block_b, _round_up(max(B, 1), 8))
    bp = _round_up(B, tb)
    if bp != B:
        x = jnp.pad(x, ((0, bp - B), (0, 0)))

    grid = (bp // tb,)

    def const_spec(arr):
        return pl.BlockSpec(arr.shape, lambda i: (0,) * arr.ndim)

    flops = 2 * bp * (in_dim * 128 + 128 * 32 + 32)
    bytes_accessed = (x.size * x.dtype.itemsize          # input rows
                      + bp * 4                           # f32 output
                      + sum(int(p.size) * p.dtype.itemsize for p in params))

    out = pl.pallas_call(
        ddpg_qnet_kernel,
        out_shape=jax.ShapeDtypeStruct((bp, 1), jnp.float32),
        grid=grid,
        in_specs=[
            pl.BlockSpec((tb, in_dim), lambda i: (i, 0)),   # x tile (pipelined)
            const_spec(w1), const_spec(b1),                 # weights resident
            const_spec(wq), const_spec(bq),
            const_spec(wo_row), const_spec(bo),
        ],
        out_specs=pl.BlockSpec((tb, 1), lambda i: (i, 0)),
        compiler_params=pltpu.CompilerParams(
            dimension_semantics=("parallel",),
            vmem_limit_bytes=32 * 1024 * 1024,
        ),
        cost_estimate=pl.CostEstimate(
            flops=flops, transcendentals=0, bytes_accessed=bytes_accessed),
    )(x, w1, b1, wq, bq, wo_row, bo)

    return out[:B]


def init_params(key, state_dim, action_dim):
    """Deterministic init mirroring nn.Linear default (uniform ±1/sqrt(fan_in)).

    Weights are repacked for the fused kernel:
      * W1 = block-diag(Ws, Wa) of shape (state_dim+action_dim, 128), bf16
      * b1 = [bs | ba] of shape (1, 128), f32
      * Wq (128, 32) bf16, bq (1, 32) f32
      * wo stored as a (1, 32) f32 row (used on the VPU), bo (1, 1) f32
    """
    def linear(key, in_dim, out_dim):
        kw, kb = jax.random.split(key)
        bound = 1.0 / np.sqrt(in_dim)
        w = jax.random.uniform(kw, (in_dim, out_dim), jnp.float32, -bound, bound)
        b = jax.random.uniform(kb, (1, out_dim), jnp.float32, -bound, bound)
        return w, b

    k1, k2, k3, k4 = jax.random.split(key, 4)
    ws, bs = linear(k1, state_dim, 64)    # fc_s
    wa, ba = linear(k2, action_dim, 64)   # fc_a
    wq, bq = linear(k3, 128, 32)          # fc_q (input = concat of 64+64)
    wo, bo = linear(k4, 32, 1)            # fc_out

    in_dim = state_dim + action_dim
    w1 = jnp.zeros((in_dim, 128), jnp.float32)
    w1 = w1.at[:state_dim, :64].set(ws)
    w1 = w1.at[state_dim:, 64:].set(wa)
    b1 = jnp.concatenate([bs, ba], axis=1)

    return (w1.astype(jnp.bfloat16), b1,
            wq.astype(jnp.bfloat16), bq,
            wo.reshape(1, 32).astype(jnp.float32), bo)


def reference_forward(s, a, params):
    """Pure-JAX reference mirroring the kernel's bf16/f32 mixed precision."""
    w1, b1, wq, bq, wo_row, bo = params
    x = jnp.concatenate([s, a], axis=1).astype(jnp.bfloat16)
    h1 = jnp.maximum(
        jnp.dot(x, w1, preferred_element_type=jnp.float32) + b1, 0.0)
    hq = jnp.maximum(
        jnp.dot(h1.astype(jnp.bfloat16), wq,
                preferred_element_type=jnp.float32) + bq, 0.0)
    return jnp.sum(hq * wo_row, axis=-1, keepdims=True) + bo


if __name__ == "__main__":
    state_dim, action_dim, batch = 16, 8, 2

    key = jax.random.PRNGKey(0)
    kp, ks, ka = jax.random.split(key, 3)

    params = init_params(kp, state_dim, action_dim)
    s = jax.random.normal(ks, (batch, state_dim), jnp.float32)
    a = jax.random.normal(ka, (batch, action_dim), jnp.float32)

    out = ddpg_qnet_forward(s, a, params)
    jax.block_until_ready(out)

    ref = reference_forward(s, a, params)
    np.testing.assert_allclose(np.asarray(out), np.asarray(ref),
                               rtol=1e-4, atol=1e-4)
    assert out.shape == (batch, 1)
    print("KERNEL_OK")
</pallas_src>

<mosaic_0001>
module attributes {stable_mosaic.version = 11 : i64} {
  func.func @ddpg_qnet_kernel(%arg0: i32, %arg1: memref<8x24xbf16, #tpu.memory_space<vmem>>, %arg2: memref<24x128xbf16, #tpu.memory_space<vmem>>, %arg3: memref<1x128xf32, #tpu.memory_space<vmem>>, %arg4: memref<128x32xbf16, #tpu.memory_space<vmem>>, %arg5: memref<1x32xf32, #tpu.memory_space<vmem>>, %arg6: memref<1x32xf32, #tpu.memory_space<vmem>>, %arg7: memref<1x1xf32, #tpu.memory_space<vmem>>, %arg8: memref<8x1xf32, #tpu.memory_space<vmem>>) attributes {dimension_semantics = [#tpu.dimension_semantics<parallel>], iteration_bounds = array<i64: 1>, scalar_prefetch = 0 : i64, scratch_operands = 0 : i64, tpu.core_type = #tpu.core_type<tc>, window_params = [{transform_indices = @transform_0, window_bounds = array<i64: 8, 24>}, {pipeline_mode = #tpu.pipeline_mode<synchronous>, transform_indices = @transform_1, window_bounds = array<i64: 24, 128>}, {pipeline_mode = #tpu.pipeline_mode<synchronous>, transform_indices = @transform_2, window_bounds = array<i64: 1, 128>}, {pipeline_mode = #tpu.pipeline_mode<synchronous>, transform_indices = @transform_3, window_bounds = array<i64: 128, 32>}, {pipeline_mode = #tpu.pipeline_mode<synchronous>, transform_indices = @transform_4, window_bounds = array<i64: 1, 32>}, {pipeline_mode = #tpu.pipeline_mode<synchronous>, transform_indices = @transform_5, window_bounds = array<i64: 1, 32>}, {pipeline_mode = #tpu.pipeline_mode<synchronous>, transform_indices = @transform_6, window_bounds = array<i64: 1, 1>}, {transform_indices = @transform_7, window_bounds = array<i64: 8, 1>}]} {
    %c0 = arith.constant 0 : index
    %c0_0 = arith.constant 0 : index
    %0 = vector.load %arg1[%c0, %c0_0] : memref<8x24xbf16, #tpu.memory_space<vmem>>, vector<8x24xbf16>
    %c0_1 = arith.constant 0 : index
    %c0_2 = arith.constant 0 : index
    %1 = vector.load %arg2[%c0_1, %c0_2] : memref<24x128xbf16, #tpu.memory_space<vmem>>, vector<24x128xbf16>
    %cst = arith.constant dense<0.000000e+00> : vector<8x128xf32>
    %2 = tpu.matmul %0, %1, %cst {dimension_numbers = #tpu.dot_dimension_numbers<[1], [0], [0], [1], [0, 0, 1, 1], [], []>} : vector<8x24xbf16>, vector<24x128xbf16>, vector<8x128xf32> -> vector<8x128xf32>
    %c0_3 = arith.constant 0 : index
    %c0_4 = arith.constant 0 : index
    %3 = vector.load %arg3[%c0_3, %c0_4] : memref<1x128xf32, #tpu.memory_space<vmem>>, vector<1x128xf32>
    %4 = vector.broadcast %3 : vector<1x128xf32> to vector<8x128xf32>
    %5 = arith.addf %2, %4 : vector<8x128xf32>
    %cst_5 = arith.constant 0.000000e+00 : f32
    %6 = vector.broadcast %cst_5 : f32 to vector<8x128xf32>
    %7 = arith.maximumf %5, %6 : vector<8x128xf32>
    %8 = arith.truncf %7 : vector<8x128xf32> to vector<8x128xbf16>
    %c0_6 = arith.constant 0 : index
    %c0_7 = arith.constant 0 : index
    %9 = vector.load %arg4[%c0_6, %c0_7] : memref<128x32xbf16, #tpu.memory_space<vmem>>, vector<128x32xbf16>
    %cst_8 = arith.constant dense<0.000000e+00> : vector<8x32xf32>
    %10 = tpu.matmul %8, %9, %cst_8 {dimension_numbers = #tpu.dot_dimension_numbers<[1], [0], [0], [1], [0, 0, 1, 1], [], []>} : vector<8x128xbf16>, vector<128x32xbf16>, vector<8x32xf32> -> vector<8x32xf32>
    %c0_9 = arith.constant 0 : index
    %c0_10 = arith.constant 0 : index
    %11 = vector.load %arg5[%c0_9, %c0_10] : memref<1x32xf32, #tpu.memory_space<vmem>>, vector<1x32xf32>
    %12 = vector.broadcast %11 : vector<1x32xf32> to vector<8x32xf32>
    %13 = arith.addf %10, %12 : vector<8x32xf32>
    %cst_11 = arith.constant 0.000000e+00 : f32
    %14 = vector.broadcast %cst_11 : f32 to vector<8x32xf32>
    %15 = arith.maximumf %13, %14 : vector<8x32xf32>
    %c0_12 = arith.constant 0 : index
    %c0_13 = arith.constant 0 : index
    %16 = vector.load %arg6[%c0_12, %c0_13] : memref<1x32xf32, #tpu.memory_space<vmem>>, vector<1x32xf32>
    %17 = vector.broadcast %16 : vector<1x32xf32> to vector<8x32xf32>
    %18 = arith.mulf %15, %17 : vector<8x32xf32>
    %cst_14 = arith.constant dense<0.000000e+00> : vector<8xf32>
    %19 = vector.multi_reduction <add>, %18, %cst_14 [1] : vector<8x32xf32> to vector<8xf32>
    %20 = vector.shape_cast %19 : vector<8xf32> to vector<8x1xf32>
    %c0_15 = arith.constant 0 : index
    %c0_16 = arith.constant 0 : index
    %21 = vector.load %arg7[%c0_15, %c0_16] : memref<1x1xf32, #tpu.memory_space<vmem>>, vector<1x1xf32>
    %22 = vector.broadcast %21 : vector<1x1xf32> to vector<8x1xf32>
    %23 = arith.addf %20, %22 : vector<8x1xf32>
    %c0_17 = arith.constant 0 : index
    %c0_18 = arith.constant 0 : index
    %24 = vector.load %arg8[%c0_17, %c0_18] : memref<8x1xf32, #tpu.memory_space<vmem>>, vector<8x1xf32>
    tpu.vector_store %arg8[%c0_17, %c0_18], %23 {strides = array<i32>} : memref<8x1xf32, #tpu.memory_space<vmem>>, vector<8x1xf32>,
    return
  }
  func.func @transform_0(%arg0: i32) -> (i32, i32) {
    %c0_i32 = arith.constant 0 : i32
    %c0_i32_0 = arith.constant 0 : i32
    return %arg0, %c0_i32 : i32, i32
  }
  func.func @transform_1(%arg0: i32) -> (i32, i32) {
    %c0_i32 = arith.constant 0 : i32
    %c0_i32_0 = arith.constant 0 : i32
    %c0_i32_1 = arith.constant 0 : i32
    return %c0_i32, %c0_i32_0 : i32, i32
  }
  func.func @transform_2(%arg0: i32) -> (i32, i32) {
    %c0_i32 = arith.constant 0 : i32
    %c0_i32_0 = arith.constant 0 : i32
    %c0_i32_1 = arith.constant 0 : i32
    return %c0_i32, %c0_i32_0 : i32, i32
  }
  func.func @transform_3(%arg0: i32) -> (i32, i32) {
    %c0_i32 = arith.constant 0 : i32
    %c0_i32_0 = arith.constant 0 : i32
    %c0_i32_1 = arith.constant 0 : i32
    return %c0_i32, %c0_i32_0 : i32, i32
  }
  func.func @transform_4(%arg0: i32) -> (i32, i32) {
    %c0_i32 = arith.constant 0 : i32
    %c0_i32_0 = arith.constant 0 : i32
    %c0_i32_1 = arith.constant 0 : i32
    return %c0_i32, %c0_i32_0 : i32, i32
  }
  func.func @transform_5(%arg0: i32) -> (i32, i32) {
    %c0_i32 = arith.constant 0 : i32
    %c0_i32_0 = arith.constant 0 : i32
    %c0_i32_1 = arith.constant 0 : i32
    return %c0_i32, %c0_i32_0 : i32, i32
  }
  func.func @transform_6(%arg0: i32) -> (i32, i32) {
    %c0_i32 = arith.constant 0 : i32
    %c0_i32_0 = arith.constant 0 : i32
    %c0_i32_1 = arith.constant 0 : i32
    return %c0_i32, %c0_i32_0 : i32, i32
  }
  func.func @transform_7(%arg0: i32) -> (i32, i32) {
    %c0_i32 = arith.constant 0 : i32
    %c0_i32_0 = arith.constant 0 : i32
    return %arg0, %c0_i32 : i32, i32
  }
}

</mosaic_0001>

<llo_original>
// kernel: tpu_custom_call.1
$region0: #{tpu_custom_call.1}
  #allocation0 [shape = 'u32[]', space=smem, size = 0x4, offset = 0x4, fixed_abs, tag = 'smem constant byte address 0x4 - core index']
  #allocation1 [shape = 'u32[144,128]{1,0:T(1,128)}', space=vmem, size = 0x12000, scoped, tag = 'internal scratch']
  #allocation2 [shape = 'f32[1,1]{1,0:T(1,128)S(1)}', space=vmem, size = 0x200, scoped, tag = 'scoped memory for tpu_custom_call.1']
  %s0 = inlined_call_operand.vmem [shape: bf16[8,24], index: 0, kind: input, shape index: {}]
  %s1 = inlined_call_operand.vmem [shape: bf16[24,128], index: 1, kind: input, shape index: {}]
  %s2 = inlined_call_operand.vmem [shape: f32[1,128], index: 2, kind: input, shape index: {}]
  %s3 = inlined_call_operand.vmem [shape: bf16[128,32], index: 3, kind: input, shape index: {}]
  %s4 = inlined_call_operand.vmem [shape: f32[1,32], index: 4, kind: input, shape index: {}]
  %s5 = inlined_call_operand.vmem [shape: f32[1,32], index: 5, kind: input, shape index: {}]
  %s6 = inlined_call_operand.<no memory space> [shape: f32[1,1], index: 6, kind: input, shape index: {}]
  %s7 = inlined_call_operand.vmem [shape: f32[8,1], index: 7, kind: output, shape index: {}]
  %s8 = sld [smem:[#allocation0]]
  $region38: #{tpu_custom_call.1} parent=0
    _
  %s10 = ssub.s32 1, %s8
  %s11 = scalar_select 0, %s10, %s8
  %v12 = vstv %s6
  %13 = vst [vmem:[#allocation2] sm:$0x1] %v12
  // Predicated region
  $region2: #{tpu_custom_call.1} parent=0 // pred_check
    _
  $region3: #{tpu_custom_call.1} parent=0 // pred_check_branch
    %15 = sbr.rel (0) target = $region5
  $region4: #{tpu_custom_call.1} parent=0 // pred_region
    _
  $region5: #{tpu_custom_call.1} parent=0 // pred_fallthru
    _
  // Predicated region
  $region6: #{tpu_custom_call.1} parent=0 // pred_check
    _
  $region7: #{tpu_custom_call.1} parent=0 // pred_check_branch
    %17 = sbr.rel (0) target = $region9
  $region8: #{tpu_custom_call.1} parent=0 // pred_region
    _
  $region9: #{tpu_custom_call.1} parent=0 // pred_fallthru
    _
  // Predicated region
  $region10: #{tpu_custom_call.1} parent=0 // pred_check
    _
  $region11: #{tpu_custom_call.1} parent=0 // pred_check_branch
    %19 = sbr.rel (0) target = $region13
  $region12: #{tpu_custom_call.1} parent=0 // pred_region
    _
  $region13: #{tpu_custom_call.1} parent=0 // pred_fallthru
    _
  // Predicated region
  $region14: #{tpu_custom_call.1} parent=0 // pred_check
    _
  $region15: #{tpu_custom_call.1} parent=0 // pred_check_branch
    %21 = sbr.rel (0) target = $region17
  $region16: #{tpu_custom_call.1} parent=0 // pred_region
    _
  $region17: #{tpu_custom_call.1} parent=0 // pred_fallthru
    _
  // Predicated region
  $region18: #{tpu_custom_call.1} parent=0 // pred_check
    _
  $region19: #{tpu_custom_call.1} parent=0 // pred_check_branch
    %23 = sbr.rel (0) target = $region21
  $region20: #{tpu_custom_call.1} parent=0 // pred_region
    _
  $region21: #{tpu_custom_call.1} parent=0 // pred_fallthru
    _
  // Predicated region
  $region22: #{tpu_custom_call.1} parent=0 // pred_check
    _
  $region23: #{tpu_custom_call.1} parent=0 // pred_check_branch
    %25 = sbr.rel (0) target = $region25
  $region24: #{tpu_custom_call.1} parent=0 // pred_region
    _
  $region25: #{tpu_custom_call.1} parent=0 // pred_fallthru
    _
  // Predicated region
  $region26: #{tpu_custom_call.1} parent=0 // pred_check
    _
  $region27: #{tpu_custom_call.1} parent=0 // pred_check_branch
    %27 = sbr.rel (0) target = $region29
  $region28: #{tpu_custom_call.1} parent=0 // pred_region
    _
  $region29: #{tpu_custom_call.1} parent=0 // pred_fallthru
    _
  %v29 = vld [vmem:[%s0] sm:$0xf]
  %v30 = vld [vmem:[%s1] sm:$0xf]
  %v31 = vld [vmem:[%s1 + $0x4] sm:$0xf]
  %v32 = vld [vmem:[%s1 + $0x8] sm:$0xf]
  %v33 = vld [vmem:[%s2] sm:$0x1]
  %v35 = vlaneseq
  %v36 = vshrl.u32 %v35, 7
  %v37 = vsub.s32 0, %v36
  %v38 = vrot.slane %v33, %v37
  %v43 = vunpack.c.l.b16 %v30
  %v44 = vunpack.c.l.b16 %v31
  %v45 = vunpack.c.l.b16 %v32
  %v46 = vpack.c.b16 %v44, %v43
  %v47 = vpack.c.b16 %v45, %v45
  %vm49 = vcmask 195584
  %v51 = vsel %vm49, %v29, 0
  %vm53 = vcmask 1043456
  %v55 = vsel %vm53, %v47, 0
  %57 = vmatprep.subr.bf16.mxu0 0
  %58 = vmatpush1.bf16.msra.mxu0 %v46
  %59 = vmatprep.subr.bf16.mxu0 0
  %60 = vmatpush1.bf16.msra.mxu0 %v55
  %61 = vmatprep.subr.bf16.mxu0 0
  %62 = vmatpush1.bf16.msra.mxu0 0
  %63 = vmatprep.subr.bf16.mxu0 0
  %64 = vmatpush1.bf16.msra.mxu0 0
  %65 = vmatprep.subr.bf16.mxu0 0
  %66 = vmatpush1.bf16.msra.mxu0 0
  %67 = vmatprep.subr.bf16.mxu0 0
  %68 = vmatpush1.bf16.msra.mxu0 0
  %69 = vmatprep.subr.bf16.mxu0 0
  %70 = vmatpush1.bf16.msra.mxu0 0
  %71 = vmatprep.subr.bf16.mxu0 0
  %72 = vmatpush1.bf16.msra.mxu0 0
  %73 = vmatprep.subr.bf16.mxu0 0
  %74 = vmatpush1.bf16.msra.mxu0 0
  %75 = vmatprep.subr.bf16.mxu0 0
  %76 = vmatpush1.bf16.msra.mxu0 0
  %77 = vmatprep.subr.bf16.mxu0 0
  %78 = vmatpush1.bf16.msra.mxu0 0
  %79 = vmatprep.subr.bf16.mxu0 0
  %80 = vmatpush1.bf16.msra.mxu0 0
  %81 = vmatprep.subr.bf16.mxu0 0
  %82 = vmatpush1.bf16.msra.mxu0 0
  %83 = vmatprep.subr.bf16.mxu0 0
  %84 = vmatpush1.bf16.msra.mxu0 0
  %85 = vmatprep.subr.bf16.mxu0 0
  %86 = vmatpush1.bf16.msra.mxu0 0
  %87 = vmatprep.subr.bf16.mxu0 0
  %88 = vmatpush1.bf16.msra.mxu0 0
  %89 = vmatprep.mubr.bf16.mxu0 0
  %90 = vmatmul.mubr.bf16.gmra.mrb[0].mxu0 %v51
  %v91 = vpop.f32.mrb[0].mxu0
  %v92 = vadd.f32 %v38, %v91
  %v93 = vpop.f32.mrb[0].mxu0
  %v94 = vpop.f32.mrb[0].mxu0
  %v95 = vpop.f32.mrb[0].mxu0
  %96 = vdwg.mxu0
  %v97 = vmax.f32 %v92, 0.0
  %v98 = vpack.c.bf16 %v97, %v97
  %v99 = vld [vmem:[%s3] sm:$0xf]
  %v100 = vld [vmem:[%s3 + $0x4] sm:$0xf]
  %v101 = vld [vmem:[%s3 + $0x8] sm:$0xf]
  %v102 = vld [vmem:[%s3 + $0xc] sm:$0xf]
  %v103 = vld [vmem:[%s3 + $0x10] sm:$0xf]
  %v104 = vld [vmem:[%s3 + $0x14] sm:$0xf]
  %v105 = vld [vmem:[%s3 + $0x18] sm:$0xf]
  %v106 = vld [vmem:[%s3 + $0x1c] sm:$0xf]
  %v107 = vld [vmem:[%s3 + $0x20] sm:$0xf]
  %v108 = vld [vmem:[%s3 + $0x24] sm:$0xf]
  %v109 = vld [vmem:[%s3 + $0x28] sm:$0xf]
  %v110 = vld [vmem:[%s3 + $0x2c] sm:$0xf]
  %v111 = vld [vmem:[%s3 + $0x30] sm:$0xf]
  %v112 = vld [vmem:[%s3 + $0x34] sm:$0xf]
  %v113 = vld [vmem:[%s3 + $0x38] sm:$0xf]
  %v114 = vld [vmem:[%s3 + $0x3c] sm:$0xf]
  %v115 = vld [vmem:[%s4] sm:$0x1]
  %v117 = vlaneseq
  %v118 = vshrl.u32 %v117, 7
  %v119 = vsub.s32 0, %v118
  %v120 = vrot.slane %v115, %v119
  %v138 = vunpack.c.l.b16 %v99
  %v139 = vunpack.c.l.b16 %v100
  %v140 = vunpack.c.l.b16 %v101
  %v141 = vunpack.c.l.b16 %v102
  %v142 = vunpack.c.l.b16 %v103
  %v143 = vunpack.c.l.b16 %v104
  %v144 = vunpack.c.l.b16 %v105
  %v145 = vunpack.c.l.b16 %v106
  %v146 = vunpack.c.l.b16 %v107
  %v147 = vunpack.c.l.b16 %v108
  %v148 = vunpack.c.l.b16 %v109
  %v149 = vunpack.c.l.b16 %v110
  %v150 = vunpack.c.l.b16 %v111
  %v151 = vunpack.c.l.b16 %v112
  %v152 = vunpack.c.l.b16 %v113
  %v153 = vunpack.c.l.b16 %v114
  %v154 = vpack.c.b16 %v139, %v138
  %v155 = vpack.c.b16 %v141, %v140
  %v156 = vpack.c.b16 %v143, %v142
  %v157 = vpack.c.b16 %v145, %v144
  %v158 = vpack.c.b16 %v147, %v146
  %v159 = vpack.c.b16 %v149, %v148
  %v160 = vpack.c.b16 %v151, %v150
  %v161 = vpack.c.b16 %v153, %v152
  %170 = vmatprep.subr.bf16.mxu0 0
  %171 = vmatpush1.bf16.msra.mxu0 %v154
  %172 = vmatprep.subr.bf16.mxu0 0
  %173 = vmatpush1.bf16.msra.mxu0 %v155
  %174 = vmatprep.subr.bf16.mxu0 0
  %175 = vmatpush1.bf16.msra.mxu0 %v156
  %176 = vmatprep.subr.bf16.mxu0 0
  %177 = vmatpush1.bf16.msra.mxu0 %v157
  %178 = vmatprep.subr.bf16.mxu0 0
  %179 = vmatpush1.bf16.msra.mxu0 %v158
  %180 = vmatprep.subr.bf16.mxu0 0
  %181 = vmatpush1.bf16.msra.mxu0 %v159
  %182 = vmatprep.subr.bf16.mxu0 0
  %183 = vmatpush1.bf16.msra.mxu0 %v160
  %184 = vmatprep.subr.bf16.mxu0 0
  %185 = vmatpush1.bf16.msra.mxu0 %v161
  %186 = vmatprep.subr.bf16.mxu0 0
  %187 = vmatpush1.bf16.msra.mxu0 0
  %188 = vmatprep.subr.bf16.mxu0 0
  %189 = vmatpush1.bf16.msra.mxu0 0
  %190 = vmatprep.subr.bf16.mxu0 0
  %191 = vmatpush1.bf16.msra.mxu0 0
  %192 = vmatprep.subr.bf16.mxu0 0
  %193 = vmatpush1.bf16.msra.mxu0 0
  %194 = vmatprep.subr.bf16.mxu0 0
  %195 = vmatpush1.bf16.msra.mxu0 0
  %196 = vmatprep.subr.bf16.mxu0 0
  %197 = vmatpush1.bf16.msra.mxu0 0
  %198 = vmatprep.subr.bf16.mxu0 0
  %199 = vmatpush1.bf16.msra.mxu0 0
  %200 = vmatprep.subr.bf16.mxu0 0
  %201 = vmatpush1.bf16.msra.mxu0 0
  %202 = vmatprep.mubr.bf16.mxu0 0
  %203 = vmatmul.mubr.bf16.gmra.mrb[0].mxu0 %v98
  %v204 = vpop.f32.mrb[0].mxu0
  %v205 = vadd.f32 %v120, %v204
  %v206 = vpop.f32.mrb[0].mxu0
  %v207 = vpop.f32.mrb[0].mxu0
  %v208 = vpop.f32.mrb[0].mxu0
  %209 = vdwg.mxu0
  %v210 = vmax.f32 %v205, 0.0
  %v211 = vld [vmem:[%s5] sm:$0x1]
  %v213 = vlaneseq
  %v214 = vshrl.u32 %v213, 7
  %v215 = vsub.s32 0, %v214
  %v216 = vrot.slane %v211, %v215
  %v218 = vmul.f32 %v210, %v216
  %vm219 = vcmask 261120
  %v220 = vsel %vm219, %v218, 0.0
  %221 = vadd.xlane.f32.xlu0 %v220
  %v222 = vpop.xlane.xlu0 %221
  %v223 = vld [vmem:[#allocation2] sm:$0x1]
  %v225 = vlaneseq
  %v226 = vshrl.u32 %v225, 7
  %v227 = vsub.s32 0, %v226
  %v228 = vrot.slane %v223, %v227
  %v230 = vadd.f32 %v222, %v228
  %vm231 = vcmask 7168
  %232 = vst.msk [vmem:[%s7] sm:$0xff] %vm231, %v230
  // Predicated region
  $region30: #{tpu_custom_call.1} parent=0 // pred_check
    _
  $region31: #{tpu_custom_call.1} parent=0 // pred_check_branch
    %234 = sbr.rel (0) target = $region33
  $region32: #{tpu_custom_call.1} parent=0 // pred_region
    _
  $region33: #{tpu_custom_call.1} parent=0 // pred_fallthru
    _
  // Predicated region
  $region34: #{tpu_custom_call.1} parent=0 // pred_check
    _
  $region35: #{tpu_custom_call.1} parent=0 // pred_check_branch
    %236 = sbr.rel (0) target = $region37
  $region36: #{tpu_custom_call.1} parent=0 // pred_region
    _
  $region37: #{tpu_custom_call.1} parent=0 // pred_fallthru
    _

</llo_original>
